<compile_context>
chip_gen: v6e
topology: v6e:2x2x1
jax: 0.10.0
libtpu: 0.0.40
codegen_flags: <defaults>
</compile_context>

<pallas_src>
import functools

import jax
import jax.numpy as jnp
from jax.experimental import pallas as pl
from jax.experimental.pallas import tpu as pltpu


def _round_up(v, m):
    return ((v + m - 1) // m) * m


def _ce_kernel(logits_ref, tgt_ref, w_ref, num_ref, den_ref,
               acc_num_ref, acc_den_ref, *,
               ignore_index, hw, t_hw, tiles_per_part):
    h_idx = pl.program_id(1)                     # pixel-axis half (parallel, megacore)
    t_idx = pl.program_id(2)                     # pixel tile within the half (reduction)
    g_idx = h_idx * tiles_per_part + t_idx       # global pixel-tile index

    # Reset the per-(n, half) accumulators at the start of each reduction sweep.
    @pl.when(t_idx == 0)
    def _():
        acc_num_ref[...] = jnp.zeros_like(acc_num_ref)
        acc_den_ref[...] = jnp.zeros_like(acc_den_ref)

    x = logits_ref[0].astype(jnp.float32)        # (C, t_hw) class on sublane, pixel on lane
    t = tgt_ref[0]                               # (1, t_hw) int32
    w = w_ref[...].astype(jnp.float32)           # (C, 1)

    # Numerically stable log-sum-exp over the class (sublane) axis.
    # max/sum go to the XLU, exp to the EUP; only (x - m) is a full-size VALU op.
    m = jnp.max(x, axis=0, keepdims=True)                                  # (1, t_hw)
    lse = jnp.log(jnp.sum(jnp.exp(x - m), axis=0, keepdims=True)) + m      # (1, t_hw)

    # One-hot gather of the target logit and its class weight.  The class iota is
    # (C, 1) and broadcasts inside the compare, so the only full-size VALU ops here
    # are one compare and two selects (old full-size sub / mul / and are gone).
    cls = jax.lax.broadcasted_iota(jnp.int32, (x.shape[0], 1), 0)          # (C, 1)
    onehot = cls == t                                                      # (C, t_hw)
    picked = jnp.sum(jnp.where(onehot, x, 0.0), axis=0, keepdims=True)     # (1, t_hw)
    wsel = jnp.sum(jnp.where(onehot, w, 0.0), axis=0, keepdims=True)       # (1, t_hw)

    # Validity: not ignore_index and inside the true H*W (ragged tails + clamped tiles).
    pos = jax.lax.broadcasted_iota(jnp.int32, t.shape, 1) + g_idx * t_hw   # (1, t_hw)
    valid = (t != ignore_index) & (pos < hw)

    # select-before-accumulate: jnp.where is a true select, so NaN/inf from garbage
    # logits in out-of-range lanes never reaches the accumulators.
    acc_num_ref[...] += jnp.where(valid, wsel * (lse - picked), 0.0)
    acc_den_ref[...] += jnp.where(valid, wsel, 0.0)

    # Collapse to per-(n, half) scalars only on the last tile of the sweep.
    @pl.when(t_idx == pl.num_programs(2) - 1)
    def _():
        num_ref[...] = jnp.sum(acc_num_ref[...]).reshape(1, 1, 1, 1)
        den_ref[...] = jnp.sum(acc_den_ref[...]).reshape(1, 1, 1, 1)


def cross_entropy_loss(logits_nchw, targets_nhw, weight, *, ignore_index=-100, t_hw=None):
    """Equivalent of NLLLoss(weight, ignore_index)(log_softmax(logits, 1), targets)."""
    N, C, H, W = logits_nchw.shape
    HW = H * W

    # Free reshapes only -- no transpose, no pad, no dtype widening (bf16 logits stay
    # bf16 in HBM and are upcast per tile inside the kernel).
    x = logits_nchw.reshape(N, C, HW)
    t = targets_nhw.reshape(N, 1, HW).astype(jnp.int32)
    w = weight.reshape(C, 1).astype(jnp.float32)
    # TODO(synk): optionally narrow targets to int16 for v5e bandwidth once the
    # ignore_index remap is plumbed through; int32 kept here for safety.

    itemsize = jnp.dtype(x.dtype).itemsize
    sublane = max(8, 32 // itemsize)             # 8 for f32, 16 for bf16
    c_pad = _round_up(C, sublane)

    # Generation-aware VMEM budget: scoped limit = ~half of physical VMEM
    # (32 MiB on v7x's 64 MiB, 64 MiB on v5e/v6e's 128 MiB).
    phys_vmem = 64 << 20
    try:
        phys_vmem = int(getattr(pltpu.get_tpu_info(), "vmem_capacity_bytes", phys_vmem))
    except Exception:
        pass
    vmem_limit = int(min(max(phys_vmem // 2, 16 << 20), 64 << 20))

    if t_hw is None:
        # Target ~4 MiB of logits per block, but keep the double-buffered working set
        # (2x logits + 2x int32 targets + 2 f32 scratch rows) under ~3/4 of the limit.
        per_px_bytes = 2 * (c_pad * itemsize + 4) + 8
        cap_vmem = max(128, ((3 * vmem_limit // 4) // per_px_bytes) // 128 * 128)
        cap_blk = max(128, ((4 << 20) // (c_pad * itemsize)) // 128 * 128)
        t_hw = max(128, min(_round_up(HW, 128), cap_blk, cap_vmem))
    else:
        t_hw = max(128, _round_up(t_hw, 128))

    num_t = pl.cdiv(HW, t_hw)
    # Second "parallel" axis over the pixel tiles so both TensorCores of a v7x chip
    # stay busy even at N == 1; near-zero cost on single-TC v5e/v6e.
    n_par = 2 if num_t >= 2 else 1
    tiles_per_part = pl.cdiv(num_t, n_par)

    def px_block(n, h, i):
        # Clamp so the (at most one) padding tile of an odd split re-reads the last
        # valid block; its contribution is zeroed in-kernel via pos < H*W.
        return (n, 0, jnp.minimum(h * tiles_per_part + i, num_t - 1))

    kernel = functools.partial(_ce_kernel, ignore_index=ignore_index, hw=HW,
                               t_hw=t_hw, tiles_per_part=tiles_per_part)
    num, den = pl.pallas_call(
        kernel,
        out_shape=(jax.ShapeDtypeStruct((N, n_par, 1, 1), jnp.float32),
                   jax.ShapeDtypeStruct((N, n_par, 1, 1), jnp.float32)),
        grid_spec=pltpu.PrefetchScalarGridSpec(
            num_scalar_prefetch=0,
            grid=(N, n_par, tiles_per_part),
            in_specs=[
                pl.BlockSpec((1, C, t_hw), px_block),                 # logits tile
                pl.BlockSpec((1, 1, t_hw), px_block),                 # target tile
                pl.BlockSpec((C, 1), lambda n, h, i: (0, 0)),         # class weights (resident)
            ],
            out_specs=[
                pl.BlockSpec((1, 1, 1, 1), lambda n, h, i: (n, h, 0, 0)),  # per-(n,half) num
                pl.BlockSpec((1, 1, 1, 1), lambda n, h, i: (n, h, 0, 0)),  # per-(n,half) den
            ],
            scratch_shapes=[
                pltpu.VMEM((1, t_hw), jnp.float32),                   # lane-dense num accumulator
                pltpu.VMEM((1, t_hw), jnp.float32),                   # lane-dense den accumulator
            ],
        ),
        compiler_params=pltpu.CompilerParams(
            dimension_semantics=("parallel", "parallel", "arbitrary"),
            vmem_limit_bytes=vmem_limit,
        ),
    )(x, t, w)

    # PyTorch weighted-'mean' NLL: sum(w_i * nll_i) / sum(w_i) over non-ignored pixels.
    # Note: if every target is ignore_index this is 0/0 = NaN, matching PyTorch.
    return jnp.sum(num) / jnp.sum(den)


def _reference(logits_nchw, targets_nhw, weight, ignore_index):
    # Pure-JAX reference matching PyTorch NLLLoss(weight, ignore_index) semantics.
    C = logits_nchw.shape[1]
    logp = jax.nn.log_softmax(logits_nchw.astype(jnp.float32), axis=1)      # (N,C,H,W)
    t = targets_nhw.astype(jnp.int32)
    t_safe = jnp.clip(t, 0, C - 1)
    picked = jnp.take_along_axis(logp, t_safe[:, None], axis=1)[:, 0]       # (N,H,W)
    valid = t != ignore_index
    w = jnp.where(valid, weight[t_safe], 0.0)
    picked = jnp.where(valid, picked, 0.0)
    return jnp.sum(-w * picked) / jnp.sum(w)


if __name__ == "__main__":
    IGNORE = 255

    # --- test 1: module-sized f32 inputs, auto tile sizing ---
    k1, k2, k3, k4 = jax.random.split(jax.random.PRNGKey(0), 4)
    N, C, H, W = 2, 4, 16, 16
    logits = jax.random.normal(k1, (N, C, H, W), dtype=jnp.float32)
    targets = jax.random.randint(k2, (N, H, W), 0, C, dtype=jnp.int32)
    targets = jnp.where(jax.random.bernoulli(k3, 0.1, (N, H, W)), IGNORE, targets)
    weight = jax.random.uniform(k4, (C,), minval=0.5, maxval=1.5, dtype=jnp.float32)

    loss = jax.block_until_ready(
        cross_entropy_loss(logits, targets, weight, ignore_index=IGNORE))
    ref = _reference(logits, targets, weight, IGNORE)
    assert jnp.allclose(loss, ref, rtol=1e-5, atol=1e-5), (loss, ref)

    # --- test 2: ragged spatial size, even tile split across the parallel pixel axis ---
    k5, k6, k7, k8 = jax.random.split(jax.random.PRNGKey(1), 4)
    N2, C2, H2, W2 = 2, 5, 10, 13
    logits2 = jax.random.normal(k5, (N2, C2, H2, W2), dtype=jnp.float32)
    targets2 = jax.random.randint(k6, (N2, H2, W2), 0, C2, dtype=jnp.int32)
    targets2 = jnp.where(jax.random.bernoulli(k7, 0.15, (N2, H2, W2)), IGNORE, targets2)
    weight2 = jax.random.uniform(k8, (C2,), minval=0.5, maxval=1.5, dtype=jnp.float32)

    loss2 = jax.block_until_ready(
        cross_entropy_loss(logits2, targets2, weight2, ignore_index=IGNORE, t_hw=128))
    ref2 = _reference(logits2, targets2, weight2, IGNORE)
    assert jnp.allclose(loss2, ref2, rtol=1e-5, atol=1e-5), (loss2, ref2)

    # --- test 3: bf16 logits, N=1, odd tile count (exercises the clamped padding tile) ---
    k9, k10, k11, k12 = jax.random.split(jax.random.PRNGKey(2), 4)
    N3, C3, H3, W3 = 1, 16, 15, 20
    logits3 = jax.random.normal(k9, (N3, C3, H3, W3), dtype=jnp.float32).astype(jnp.bfloat16)
    targets3 = jax.random.randint(k10, (N3, H3, W3), 0, C3, dtype=jnp.int32)
    targets3 = jnp.where(jax.random.bernoulli(k11, 0.1, (N3, H3, W3)), IGNORE, targets3)
    weight3 = jax.random.uniform(k12, (C3,), minval=0.5, maxval=1.5, dtype=jnp.float32)

    loss3 = jax.block_until_ready(
        cross_entropy_loss(logits3, targets3, weight3, ignore_index=IGNORE, t_hw=128))
    ref3 = _reference(logits3, targets3, weight3, IGNORE)
    assert jnp.allclose(loss3, ref3, rtol=1e-4, atol=1e-4), (loss3, ref3)

    print("KERNEL_OK")
</pallas_src>

<mosaic_0001>
module attributes {stable_mosaic.version = 11 : i64} {
  func.func @_ce_kernel(%arg0: i32, %arg1: i32, %arg2: i32, %arg3: memref<1x4x256xf32, #tpu.memory_space<vmem>>, %arg4: memref<1x1x256xi32, #tpu.memory_space<vmem>>, %arg5: memref<4x1xf32, #tpu.memory_space<vmem>>, %arg6: memref<1x1x1x1xf32, #tpu.memory_space<vmem>>, %arg7: memref<1x1x1x1xf32, #tpu.memory_space<vmem>>, %arg8: memref<1x256xf32, #tpu.memory_space<vmem>>, %arg9: memref<1x256xf32, #tpu.memory_space<vmem>>) attributes {dimension_semantics = [#tpu.dimension_semantics<parallel>, #tpu.dimension_semantics<parallel>, #tpu.dimension_semantics<arbitrary>], iteration_bounds = array<i64: 2, 1, 1>, scalar_prefetch = 0 : i64, scratch_operands = 2 : i64, tpu.core_type = #tpu.core_type<tc>, window_params = [{transform_indices = @transform_0, window_bounds = array<i64: 1, 4, 256>}, {transform_indices = @transform_1, window_bounds = array<i64: 1, 1, 256>}, {pipeline_mode = #tpu.pipeline_mode<synchronous>, transform_indices = @transform_2, window_bounds = array<i64: 4, 1>}, {transform_indices = @transform_3, window_bounds = array<i64: 1, 1, 1, 1>}, {transform_indices = @transform_4, window_bounds = array<i64: 1, 1, 1, 1>}]} {
    %c1_i32 = arith.constant 1 : i32
    %0 = arith.muli %arg1, %c1_i32 : i32
    %1 = arith.addi %0, %arg2 : i32
    %c0_i32 = arith.constant 0 : i32
    %2 = arith.cmpi eq, %arg2, %c0_i32 : i32
    %3 = arith.extui %2 : i1 to i32
    %c0_i32_0 = arith.constant 0 : i32
    %4 = arith.cmpi ne, %3, %c0_i32_0 : i32
    scf.if %4 {
      %cst_26 = arith.constant 0.000000e+00 : f32
      %57 = vector.broadcast %cst_26 : f32 to vector<1x256xf32>
      %c0_27 = arith.constant 0 : index
      %c0_28 = arith.constant 0 : index
      %58 = vector.load %arg8[%c0_27, %c0_28] : memref<1x256xf32, #tpu.memory_space<vmem>>, vector<1x256xf32>
      tpu.vector_store %arg8[%c0_27, %c0_28], %57 {strides = array<i32>} : memref<1x256xf32, #tpu.memory_space<vmem>>, vector<1x256xf32>,
      %cst_29 = arith.constant 0.000000e+00 : f32
      %59 = vector.broadcast %cst_29 : f32 to vector<1x256xf32>
      %c0_30 = arith.constant 0 : index
      %c0_31 = arith.constant 0 : index
      %60 = vector.load %arg9[%c0_30, %c0_31] : memref<1x256xf32, #tpu.memory_space<vmem>>, vector<1x256xf32>
      tpu.vector_store %arg9[%c0_30, %c0_31], %59 {strides = array<i32>} : memref<1x256xf32, #tpu.memory_space<vmem>>, vector<1x256xf32>,
    } else {
    }
    %c0 = arith.constant 0 : index
    %c0_1 = arith.constant 0 : index
    %c0_2 = arith.constant 0 : index
    %5 = vector.load %arg3[%c0, %c0_1, %c0_2] : memref<1x4x256xf32, #tpu.memory_space<vmem>>, vector<1x4x256xf32>
    %6 = vector.shape_cast %5 : vector<1x4x256xf32> to vector<4x256xf32>
    %c0_3 = arith.constant 0 : index
    %c0_4 = arith.constant 0 : index
    %c0_5 = arith.constant 0 : index
    %7 = vector.load %arg4[%c0_3, %c0_4, %c0_5] : memref<1x1x256xi32, #tpu.memory_space<vmem>>, vector<1x1x256xi32>
    %8 = vector.shape_cast %7 : vector<1x1x256xi32> to vector<1x256xi32>
    %c0_6 = arith.constant 0 : index
    %c0_7 = arith.constant 0 : index
    %9 = vector.load %arg5[%c0_6, %c0_7] : memref<4x1xf32, #tpu.memory_space<vmem>>, vector<4x1xf32>
    %cst = arith.constant dense<0xFF800000> : vector<256xf32>
    %10 = vector.multi_reduction <maximumf>, %6, %cst [0] : vector<4x256xf32> to vector<256xf32>
    %11 = vector.shape_cast %10 : vector<256xf32> to vector<1x256xf32>
    %12 = vector.broadcast %11 : vector<1x256xf32> to vector<4x256xf32>
    %13 = arith.subf %6, %12 : vector<4x256xf32>
    %14 = math.exp %13 : vector<4x256xf32>
    %cst_8 = arith.constant dense<0.000000e+00> : vector<256xf32>
    %15 = vector.multi_reduction <add>, %14, %cst_8 [0] : vector<4x256xf32> to vector<256xf32>
    %16 = vector.shape_cast %15 : vector<256xf32> to vector<1x256xf32>
    %17 = math.log %16 : vector<1x256xf32>
    %18 = arith.addf %17, %11 : vector<1x256xf32>
    %19 = tpu.iota {dimensions = array<i32: 0>} : vector<4x1xi32>
    %20 = vector.broadcast %19 : vector<4x1xi32> to vector<4x256xi32>
    %21 = vector.broadcast %8 : vector<1x256xi32> to vector<4x256xi32>
    %22 = arith.cmpi eq, %20, %21 : vector<4x256xi32>
    %cst_9 = arith.constant 0.000000e+00 : f32
    %23 = vector.broadcast %cst_9 : f32 to vector<4x256xf32>
    %24 = arith.select %22, %6, %23 : vector<4x256xi1>, vector<4x256xf32>
    %cst_10 = arith.constant dense<0.000000e+00> : vector<256xf32>
    %25 = vector.multi_reduction <add>, %24, %cst_10 [0] : vector<4x256xf32> to vector<256xf32>
    %26 = vector.shape_cast %25 : vector<256xf32> to vector<1x256xf32>
    %cst_11 = arith.constant 0.000000e+00 : f32
    %27 = vector.shape_cast %9 : vector<4x1xf32> to vector<4x1xf32>
    %28 = vector.broadcast %27 : vector<4x1xf32> to vector<4x256xf32>
    %29 = vector.broadcast %cst_11 : f32 to vector<4x256xf32>
    %30 = arith.select %22, %28, %29 : vector<4x256xi1>, vector<4x256xf32>
    %cst_12 = arith.constant dense<0.000000e+00> : vector<256xf32>
    %31 = vector.multi_reduction <add>, %30, %cst_12 [0] : vector<4x256xf32> to vector<256xf32>
    %32 = vector.shape_cast %31 : vector<256xf32> to vector<1x256xf32>
    %33 = tpu.iota {dimensions = array<i32: 1>} : vector<1x256xi32>
    %c256_i32 = arith.constant 256 : i32
    %34 = arith.muli %1, %c256_i32 : i32
    %35 = vector.broadcast %34 : i32 to vector<1x256xi32>
    %36 = arith.addi %33, %35 : vector<1x256xi32>
    %c255_i32 = arith.constant 255 : i32
    %37 = vector.broadcast %c255_i32 : i32 to vector<1x256xi32>
    %38 = arith.cmpi ne, %8, %37 : vector<1x256xi32>
    %c256_i32_13 = arith.constant 256 : i32
    %39 = vector.broadcast %c256_i32_13 : i32 to vector<1x256xi32>
    %40 = arith.cmpi slt, %36, %39 : vector<1x256xi32>
    %41 = arith.andi %38, %40 : vector<1x256xi1>
    %c0_14 = arith.constant 0 : index
    %c0_15 = arith.constant 0 : index
    %42 = vector.load %arg8[%c0_14, %c0_15] : memref<1x256xf32, #tpu.memory_space<vmem>>, vector<1x256xf32>
    %43 = arith.subf %18, %26 : vector<1x256xf32>
    %44 = arith.mulf %32, %43 : vector<1x256xf32>
    %cst_16 = arith.constant 0.000000e+00 : f32
    %45 = vector.broadcast %cst_16 : f32 to vector<1x256xf32>
    %46 = arith.select %41, %44, %45 : vector<1x256xi1>, vector<1x256xf32>
    %47 = arith.addf %42, %46 : vector<1x256xf32>
    %c0_17 = arith.constant 0 : index
    %c0_18 = arith.constant 0 : index
    %48 = vector.load %arg8[%c0_17, %c0_18] : memref<1x256xf32, #tpu.memory_space<vmem>>, vector<1x256xf32>
    tpu.vector_store %arg8[%c0_17, %c0_18], %47 {strides = array<i32>} : memref<1x256xf32, #tpu.memory_space<vmem>>, vector<1x256xf32>,
    %c0_19 = arith.constant 0 : index
    %c0_20 = arith.constant 0 : index
    %49 = vector.load %arg9[%c0_19, %c0_20] : memref<1x256xf32, #tpu.memory_space<vmem>>, vector<1x256xf32>
    %cst_21 = arith.constant 0.000000e+00 : f32
    %50 = vector.broadcast %cst_21 : f32 to vector<1x256xf32>
    %51 = arith.select %41, %32, %50 : vector<1x256xi1>, vector<1x256xf32>
    %52 = arith.addf %49, %51 : vector<1x256xf32>
    %c0_22 = arith.constant 0 : index
    %c0_23 = arith.constant 0 : index
    %53 = vector.load %arg9[%c0_22, %c0_23] : memref<1x256xf32, #tpu.memory_space<vmem>>, vector<1x256xf32>
    tpu.vector_store %arg9[%c0_22, %c0_23], %52 {strides = array<i32>} : memref<1x256xf32, #tpu.memory_space<vmem>>, vector<1x256xf32>,
    %c0_i32_24 = arith.constant 0 : i32
    %54 = arith.cmpi eq, %arg2, %c0_i32_24 : i32
    %55 = arith.extui %54 : i1 to i32
    %c0_i32_25 = arith.constant 0 : i32
    %56 = arith.cmpi ne, %55, %c0_i32_25 : i32
    scf.if %56 {
      %c0_26 = arith.constant 0 : index
      %c0_27 = arith.constant 0 : index
      %57 = vector.load %arg8[%c0_26, %c0_27] : memref<1x256xf32, #tpu.memory_space<vmem>>, vector<1x256xf32>
      %58 = vector.shape_cast %57 : vector<1x256xf32> to vector<1x1x256xf32>
      %cst_28 = arith.constant dense<0.000000e+00> : vector<1xf32>
      %59 = vector.multi_reduction <add>, %58, %cst_28 [1, 2] : vector<1x1x256xf32> to vector<1xf32>
      %60 = vector.shape_cast %59 : vector<1xf32> to vector<1x1x1xf32>
      %61 = vector.extract %60[0, 0, 0] : f32 from vector<1x1x1xf32>
      %62 = vector.broadcast %61 : f32 to vector<1x1x1x1xf32>
      %c0_29 = arith.constant 0 : index
      %c0_30 = arith.constant 0 : index
      %c0_31 = arith.constant 0 : index
      %c0_32 = arith.constant 0 : index
      %63 = vector.load %arg6[%c0_29, %c0_30, %c0_31, %c0_32] : memref<1x1x1x1xf32, #tpu.memory_space<vmem>>, vector<1x1x1x1xf32>
      tpu.vector_store %arg6[%c0_29, %c0_30, %c0_31, %c0_32], %62 {strides = array<i32>} : memref<1x1x1x1xf32, #tpu.memory_space<vmem>>, vector<1x1x1x1xf32>,
      %c0_33 = arith.constant 0 : index
      %c0_34 = arith.constant 0 : index
      %64 = vector.load %arg9[%c0_33, %c0_34] : memref<1x256xf32, #tpu.memory_space<vmem>>, vector<1x256xf32>
      %65 = vector.shape_cast %64 : vector<1x256xf32> to vector<1x1x256xf32>
      %cst_35 = arith.constant dense<0.000000e+00> : vector<1xf32>
      %66 = vector.multi_reduction <add>, %65, %cst_35 [1, 2] : vector<1x1x256xf32> to vector<1xf32>
      %67 = vector.shape_cast %66 : vector<1xf32> to vector<1x1x1xf32>
      %68 = vector.extract %67[0, 0, 0] : f32 from vector<1x1x1xf32>
      %69 = vector.broadcast %68 : f32 to vector<1x1x1x1xf32>
      %c0_36 = arith.constant 0 : index
      %c0_37 = arith.constant 0 : index
      %c0_38 = arith.constant 0 : index
      %c0_39 = arith.constant 0 : index
      %70 = vector.load %arg7[%c0_36, %c0_37, %c0_38, %c0_39] : memref<1x1x1x1xf32, #tpu.memory_space<vmem>>, vector<1x1x1x1xf32>
      tpu.vector_store %arg7[%c0_36, %c0_37, %c0_38, %c0_39], %69 {strides = array<i32>} : memref<1x1x1x1xf32, #tpu.memory_space<vmem>>, vector<1x1x1x1xf32>,
    } else {
    }
    return
  }
  func.func @transform_0(%arg0: i32, %arg1: i32, %arg2: i32) -> (i32, i32, i32) {
    %c1_i32 = arith.constant 1 : i32
    %0 = arith.muli %arg1, %c1_i32 : i32
    %1 = arith.addi %0, %arg2 : i32
    %c0_i32 = arith.constant 0 : i32
    %2 = arith.minsi %1, %c0_i32 : i32
    %c0_i32_0 = arith.constant 0 : i32
    %c0_i32_1 = arith.constant 0 : i32
    return %arg0, %c0_i32_0, %2 : i32, i32, i32
  }
  func.func @transform_1(%arg0: i32, %arg1: i32, %arg2: i32) -> (i32, i32, i32) {
    %c1_i32 = arith.constant 1 : i32
    %0 = arith.muli %arg1, %c1_i32 : i32
    %1 = arith.addi %0, %arg2 : i32
    %c0_i32 = arith.constant 0 : i32
    %2 = arith.minsi %1, %c0_i32 : i32
    %c0_i32_0 = arith.constant 0 : i32
    %c0_i32_1 = arith.constant 0 : i32
    return %arg0, %c0_i32_0, %2 : i32, i32, i32
  }
  func.func @transform_2(%arg0: i32, %arg1: i32, %arg2: i32) -> (i32, i32) {
    %c0_i32 = arith.constant 0 : i32
    %c0_i32_0 = arith.constant 0 : i32
    %c0_i32_1 = arith.constant 0 : i32
    return %c0_i32, %c0_i32_0 : i32, i32
  }
  func.func @transform_3(%arg0: i32, %arg1: i32, %arg2: i32) -> (i32, i32, i32, i32) {
    %c0_i32 = arith.constant 0 : i32
    %c0_i32_0 = arith.constant 0 : i32
    %c0_i32_1 = arith.constant 0 : i32
    return %arg0, %arg1, %c0_i32, %c0_i32_0 : i32, i32, i32, i32
  }
  func.func @transform_4(%arg0: i32, %arg1: i32, %arg2: i32) -> (i32, i32, i32, i32) {
    %c0_i32 = arith.constant 0 : i32
    %c0_i32_0 = arith.constant 0 : i32
    %c0_i32_1 = arith.constant 0 : i32
    return %arg0, %arg1, %c0_i32, %c0_i32_0 : i32, i32, i32, i32
  }
}

</mosaic_0001>

<llo_original>
// kernel: tpu_custom_call.1
$region0: #{tpu_custom_call.1}
  #allocation0 [shape = 'u32[]', space=smem, size = 0x4, offset = 0x4, fixed_abs, tag = 'smem constant byte address 0x4 - core index']
  #allocation1 [shape = 'u32[144,128]{1,0:T(1,128)}', space=vmem, size = 0x12000, scoped, tag = 'internal scratch']
  #allocation2 [shape = 'f32[1,256]{1,0:T(1,128)}', space=vmem, size = 0x400, scoped, tag = 'scratch operand']
  #allocation3 [shape = 'f32[1,256]{1,0:T(1,128)}', space=vmem, size = 0x400, scoped, tag = 'scratch operand']
  %s0 = inlined_call_operand.hbm [shape: f32[2,4,256], index: 0, kind: input, shape index: {}]
  %s1 = inlined_call_operand.vmem [shape: s32[2,1,256], index: 1, kind: input, shape index: {}]
  %s2 = inlined_call_operand.vmem [shape: f32[4,1], index: 2, kind: input, shape index: {}]
  %s3 = inlined_call_operand.vmem [shape: f32[2,1,1,1], index: 3, kind: output, shape index: {0}]
  %s4 = inlined_call_operand.vmem [shape: f32[2,1,1,1], index: 4, kind: output, shape index: {1}]
  %5 = xla_tuple %s3, %s4
  %s6 = sld [smem:[#allocation0]]
  $region65: #{tpu_custom_call.1} parent=0
    _
  %s8 = ssub.s32 1, %s6
  %s9 = scalar_select 0, %s8, %s6
  $region1: #{tpu_custom_call.1} parent=0
    #allocation4 [shape = 'u8[8192]{0}', space=vmem, size = 0x2000, scoped, tag = 'input window, operand 0']
    #allocation5 [shape = 's32[2]{0}', space=sflag, size = 0x8, scoped, tag = 'scoped memory for tpu_custom_call.1']
    %10 = vsyncpa [#allocation5], 0
    %s11 = scalar_lea.sflag [#allocation5], 1
    %12 = vsyncpa %s11, 0
    loop: start=0, step=1, limit=4
    $region2: #{tpu_custom_call.1} parent=1 // loop_pre_header
      _
    $region3: #{tpu_custom_call.1} parent=1 // loop_header
      %s14 = sphi 0, %s18
      %p15 = scmp.ge.s32.totalorder %s14, 4
      %s21 = sphi 0, %s40
      %s22 = sphi 0, %s36
      %s23 = sphi 0, %s32
      %s24 = sphi 0, %s21
      %s25 = sphi 0, %s22
      %s26 = sphi 0, %s23
      %s27 = sphi 0, %s24
      %s28 = sphi 0, %s25
      %s29 = sphi 0, %s26
      %s51 = sphi 0, %s53
      %s54 = sphi 0, %s51
      %s55 = sphi 0, %s54
      %s71 = sphi 0, %s55
      %s85 = sphi 0, %s87
      %s88 = sphi 0, %s85
      %s89 = sphi 0, %s88
      %s105 = sphi 0, %s89
      %s109 = sphi 0, %s109
      %s111 = sphi 0, %s109
      %s112 = sphi 0, %s111
      %s126 = sphi 0, %s112
      %s134 = sphi 0, %s136
      %s137 = sphi 0, %s134
      %s138 = sphi 0, %s137
      %s154 = sphi 0, %s138
      %s162 = sphi 0, %s164
      %s165 = sphi 0, %s162
      %s166 = sphi 0, %s165
      %s182 = sphi 0, %s166
    $region4: #{tpu_custom_call.1} parent=1 // loop_header_branch
      %17 = sbr.rel (%p15) target = $region8
    $region5: #{tpu_custom_call.1} parent=1 // loop_body
      %s19 = ssub.s32 %s14, 1
      %s20 = ssub.s32 %s14, 2
      %s30 = sadd.s32 1, %s23
      %p31 = scmp.ge.s32.totalorder %s30, 1
      %s32 = scalar_select %p31, 0, %s30
      %s33 = sadd.s32 1, %s22
      %s34 = scalar_select %p31, %s33, %s22
      %p35 = scmp.ge.s32.totalorder %s34, 1
      %s36 = scalar_select %p35, 0, %s34
      %s37 = sadd.s32 1, %s21
      %s38 = scalar_select %p35, %s37, %s21
      %p39 = scmp.ge.s32.totalorder %s38, 2
      %s40 = scalar_select %p39, 0, %s38
      %s41 = sadd.s32 %s22, %s23
      %p42 = scmp.lt.s32.totalorder %s41, 0
      %s43 = scalar_select %p42, %s41, 0
      %s44 = sadd.s32 %s36, %s32
      %p45 = scmp.lt.s32.totalorder %s44, 0
      %s46 = scalar_select %p45, %s44, 0
      %s47 = ssub.s32 %s21, %s40
      %s48 = ssub.s32 %s43, %s46
      %s49 = sor.u32 %s47, %s48
      %p50 = scmp.eq.s32.totalorder %s49, 0
      %s52 = sadd.s32 %s51, 1
      %s53 = scalar_select %p50, %s51, %s52
      %p56 = pneg %p50
      %p57 = scmp.eq.s32.totalorder %s14, 1
      %p58 = por %p56, %p57
      %p59 = scmp.ne.s32.totalorder %s51, %s54
      %p60 = scmp.eq.s32.totalorder %s14, 0
      %p61 = por %p59, %p60
      %p62 = scmp.ne.s32.totalorder %s51, %s54
      %p63 = scmp.eq.s32.totalorder %s19, 1
      %p64 = por %p62, %p63
      %p65 = scmp.ne.s32.totalorder %s54, %s55
      %p66 = scmp.eq.s32.totalorder %s19, 0
      %p67 = por %p65, %p66
      %p68 = scmp.ne.s32.totalorder %s54, %s55
      %p69 = scmp.eq.s32.totalorder %s20, 1
      %p70 = por %p68, %p69
      %p72 = scmp.ne.s32.totalorder %s55, %s71
      %p73 = scmp.eq.s32.totalorder %s20, 0
      %p74 = por %p72, %p73
      %s75 = sadd.s32 %s22, %s23
      %p76 = scmp.lt.s32.totalorder %s75, 0
      %s77 = scalar_select %p76, %s75, 0
      %s78 = sadd.s32 %s36, %s32
      %p79 = scmp.lt.s32.totalorder %s78, 0
      %s80 = scalar_select %p79, %s78, 0
      %s81 = ssub.s32 %s21, %s40
      %s82 = ssub.s32 %s77, %s80
      %s83 = sor.u32 %s81, %s82
      %p84 = scmp.eq.s32.totalorder %s83, 0
      %s86 = sadd.s32 %s85, 1
      %s87 = scalar_select %p84, %s85, %s86
      %p90 = pneg %p84
      %p91 = scmp.eq.s32.totalorder %s14, 1
      %p92 = por %p90, %p91
      %p93 = scmp.ne.s32.totalorder %s85, %s88
      %p94 = scmp.eq.s32.totalorder %s14, 0
      %p95 = por %p93, %p94
      %p96 = scmp.ne.s32.totalorder %s85, %s88
      %p97 = scmp.eq.s32.totalorder %s19, 1
      %p98 = por %p96, %p97
      %p99 = scmp.ne.s32.totalorder %s88, %s89
      %p100 = scmp.eq.s32.totalorder %s19, 0
      %p101 = por %p99, %p100
      %p102 = scmp.ne.s32.totalorder %s88, %s89
      %p103 = scmp.eq.s32.totalorder %s20, 1
      %p104 = por %p102, %p103
      %p106 = scmp.ne.s32.totalorder %s89, %s105
      %p107 = scmp.eq.s32.totalorder %s20, 0
      %p108 = por %p106, %p107
      %s110 = sadd.s32 %s109, 1
      %p113 = scmp.eq.s32.totalorder %s14, 1
      %p114 = scmp.ne.s32.totalorder %s109, %s111
      %p115 = scmp.eq.s32.totalorder %s14, 0
      %p116 = por %p114, %p115
      %p117 = scmp.ne.s32.totalorder %s109, %s111
      %p118 = scmp.eq.s32.totalorder %s19, 1
      %p119 = por %p117, %p118
      %p120 = scmp.ne.s32.totalorder %s111, %s112
      %p121 = scmp.eq.s32.totalorder %s19, 0
      %p122 = por %p120, %p121
      %p123 = scmp.ne.s32.totalorder %s111, %s112
      %p124 = scmp.eq.s32.totalorder %s20, 1
      %p125 = por %p123, %p124
      %p127 = scmp.ne.s32.totalorder %s112, %s126
      %p128 = scmp.eq.s32.totalorder %s20, 0
      %p129 = por %p127, %p128
      %s130 = ssub.s32 %s21, %s40
      %s131 = ssub.s32 %s22, %s36
      %s132 = sor.u32 %s130, %s131
      %p133 = scmp.eq.s32.totalorder %s132, 0
      %s135 = sadd.s32 %s134, 1
      %s136 = scalar_select %p133, %s134, %s135
      %p139 = pneg %p133
      %p140 = scmp.eq.s32.totalorder %s14, 1
      %p141 = por %p139, %p140
      %p142 = scmp.ne.s32.totalorder %s134, %s137
      %p143 = scmp.eq.s32.totalorder %s14, 0
      %p144 = por %p142, %p143
      %p145 = scmp.ne.s32.totalorder %s134, %s137
      %p146 = scmp.eq.s32.totalorder %s19, 1
      %p147 = por %p145, %p146
      %p148 = scmp.ne.s32.totalorder %s137, %s138
      %p149 = scmp.eq.s32.totalorder %s19, 0
      %p150 = por %p148, %p149
      %p151 = scmp.ne.s32.totalorder %s137, %s138
      %p152 = scmp.eq.s32.totalorder %s20, 1
      %p153 = por %p151, %p152
      %p155 = scmp.ne.s32.totalorder %s138, %s154
      %p156 = scmp.eq.s32.totalorder %s20, 0
      %p157 = por %p155, %p156
      %s158 = ssub.s32 %s21, %s40
      %s159 = ssub.s32 %s22, %s36
      %s160 = sor.u32 %s158, %s159
      %p161 = scmp.eq.s32.totalorder %s160, 0
      %s163 = sadd.s32 %s162, 1
      %s164 = scalar_select %p161, %s162, %s163
      %p167 = pneg %p161
      %p168 = scmp.eq.s32.totalorder %s14, 1
      %p169 = por %p167, %p168
      %p170 = scmp.ne.s32.totalorder %s162, %s165
      %p171 = scmp.eq.s32.totalorder %s14, 0
      %p172 = por %p170, %p171
      %p173 = scmp.ne.s32.totalorder %s162, %s165
      %p174 = scmp.eq.s32.totalorder %s19, 1
      %p175 = por %p173, %p174
      %p176 = scmp.ne.s32.totalorder %s165, %s166
      %p177 = scmp.eq.s32.totalorder %s19, 0
      %p178 = por %p176, %p177
      %p179 = scmp.ne.s32.totalorder %s165, %s166
      %p180 = scmp.eq.s32.totalorder %s20, 1
      %p181 = por %p179, %p180
      %p183 = scmp.ne.s32.totalorder %s166, %s182
      %p184 = scmp.eq.s32.totalorder %s20, 0
      %p185 = por %p183, %p184
      %p186 = scmp.le.s32.totalorder 1, %s14
      %p187 = scmp.lt.s32.totalorder %s14, 3
      %p188 = pnand %p186, %p187
      %p189 = pneg %p188
      // Predicated region
      $region9: #{tpu_custom_call.1} parent=5 // pred_check
        _
      $region10: #{tpu_custom_call.1} parent=5 // pred_check_branch
        %191 = sbr.rel (%p188) target = $region12
      $region11: #{tpu_custom_call.1} parent=5 // pred_region
        %s192 = ssub.s32 %s14, 1
        // Predicated region
        $region13: #{tpu_custom_call.1} parent=11 // pred_check
          %p193 = pneg %p122
        $region14: #{tpu_custom_call.1} parent=11 // pred_check_branch
          %195 = sbr.rel (%p193) target = $region16
        $region15: #{tpu_custom_call.1} parent=11 // pred_region
          _
        $region16: #{tpu_custom_call.1} parent=11 // pred_fallthru
          _
      $region12: #{tpu_custom_call.1} parent=5 // pred_fallthru
        _
      %p196 = scmp.lt.s32.totalorder %s14, 2
      // Predicated region
      $region17: #{tpu_custom_call.1} parent=5 // pred_check
        %p197 = pneg %p196
      $region18: #{tpu_custom_call.1} parent=5 // pred_check_branch
        %199 = sbr.rel (%p197) target = $region20
      $region19: #{tpu_custom_call.1} parent=5 // pred_region
        // Predicated region
        $region21: #{tpu_custom_call.1} parent=19 // pred_check
          %p200 = pneg %p61
        $region22: #{tpu_custom_call.1} parent=19 // pred_check_branch
          %202 = sbr.rel (%p200) target = $region24
        $region23: #{tpu_custom_call.1} parent=19 // pred_region
          %s203 = sand.u32 %s51, 1
          %s204 = scalar_lea.sflag [#allocation5], %s203
          %s205 = sand.u32 %s51, 1
          %s206 = smul.addr %s205, 8
          %s207 = scalar_lea.vmem [#allocation4], %s206
          %s208 = sadd.s32 %s22, %s23
          %p209 = scmp.lt.s32.totalorder %s208, 0
          %s210 = scalar_select %p209, %s208, 0
          %s211 = smul.u32 2, %s210
          %s213 = ssub.s32 128, 128
          %214 = vsyncadd %s204, %s213
          %s215 = smul.addr %s21, 2
          %s216 = sadd.s32 %s211, %s215
          %s217 = smul.addr %s216, 64
          %s218 = scalar_lea.hbm %s0, %s217
          %s220 = sshll.u32 %s207, 4
          %s221 = int_to_ptr.vmem [resolvable:$true] %s220
          %223 = dma.hbm_to_vmem [thread:$0]  %s218, 128, %s221, %s204
        $region24: #{tpu_custom_call.1} parent=19 // pred_fallthru
          _
        // Predicated region
        $region25: #{tpu_custom_call.1} parent=19 // pred_check
          %p224 = pneg %p95
        $region26: #{tpu_custom_call.1} parent=19 // pred_check_branch
          %226 = sbr.rel (%p224) target = $region28
        $region27: #{tpu_custom_call.1} parent=19 // pred_region
          %s227 = sadd.s32 %s22, %s23
          %p228 = scmp.lt.s32.totalorder %s227, 0
          %s229 = scalar_select %p228, %s227, 0
          %s230 = smul.u32 2, %s229
          %p231 = scmp.lt.s32.totalorder %s21, 1
          %s232 = scalar_select %p231, %s21, 1
          %p233 = scmp.lt.s32.totalorder %s230, 1
          %s234 = scalar_select %p233, %s230, 1
          %s235 = smul.addr %s232, 2
          %s236 = sadd.s32 %s234, %s235
          %s237 = scalar_lea.vmem %s1, %s236
          %s238 = sadd.s32 %s22, %s23
          %p239 = scmp.lt.s32.totalorder %s238, 0
          %s240 = scalar_select %p239, %s238, 0
          %s241 = smul.u32 2, %s240
        $region28: #{tpu_custom_call.1} parent=19 // pred_fallthru
          _
      $region20: #{tpu_custom_call.1} parent=5 // pred_fallthru
        _
      %p242 = scmp.le.s32.totalorder 1, %s14
      %p243 = scmp.lt.s32.totalorder %s14, 3
      %p244 = pnand %p242, %p243
      %p245 = pneg %p244
      // Predicated region
      $region29: #{tpu_custom_call.1} parent=5 // pred_check
        _
      $region30: #{tpu_custom_call.1} parent=5 // pred_check_branch
        %247 = sbr.rel (%p244) target = $region32
      $region31: #{tpu_custom_call.1} parent=5 // pred_region
        %s248 = ssub.s32 %s14, 1
        %s249 = sand.u32 %s54, 1
        %s250 = scalar_lea.sflag [#allocation5], %s249
        %s251 = sand.u32 %s54, 1
        %s252 = smul.addr %s251, 8
        %s253 = scalar_lea.vmem [#allocation4], %s252
        // Predicated region
        $region33: #{tpu_custom_call.1} parent=31 // pred_check
          %p254 = pneg %p67
        $region34: #{tpu_custom_call.1} parent=31 // pred_check_branch
          %256 = sbr.rel (%p254) target = $region36
        $region35: #{tpu_custom_call.1} parent=31 // pred_region
          %257 = dma.done %s250, 128
        $region36: #{tpu_custom_call.1} parent=31 // pred_fallthru
          _
        %s258 = sand.u32 %s54, 1
        %s259 = scalar_lea.sflag [#allocation5], %s258
        %s260 = sand.u32 %s54, 1
        %s261 = smul.addr %s260, 8
        %s262 = scalar_lea.vmem [#allocation4], %s261
        %p263 = pneg %p67
        %p264 = pneg %p64
        %s265 = sadd.s32 %s25, %s26
        %p266 = scmp.lt.s32.totalorder %s265, 0
        %s267 = scalar_select %p266, %s265, 0
        %s268 = smul.u32 2, %s267
        %p269 = scmp.lt.s32.totalorder %s24, 1
        %s270 = scalar_select %p269, %s24, 1
        %p271 = scmp.lt.s32.totalorder %s268, 1
        %s272 = scalar_select %p271, %s268, 1
        %s273 = smul.addr %s270, 2
        %s274 = sadd.s32 %s272, %s273
        %s275 = scalar_lea.vmem %s1, %s274
        %p276 = pneg %p101
        %p277 = pneg %p98
        %p278 = pneg %p122
        %p279 = pneg %p119
        %p280 = pneg %p150
        %p281 = pneg %p147
        %p282 = scmp.lt.s32.totalorder %s24, 1
        %s283 = scalar_select %p282, %s24, 1
        %p284 = scmp.lt.s32.totalorder %s25, 0
        %s285 = scalar_select %p284, %s25, 0
        %s286 = sadd.s32 %s285, %s283
        %s287 = scalar_lea.vmem %s3, %s286
        %p288 = pneg %p178
        %p289 = pneg %p175
        %p290 = scmp.lt.s32.totalorder %s24, 1
        %s291 = scalar_select %p290, %s24, 1
        %p292 = scmp.lt.s32.totalorder %s25, 0
        %s293 = scalar_select %p292, %s25, 0
        %s294 = sadd.s32 %s293, %s291
        %s295 = scalar_lea.vmem %s4, %s294
        %s296 = sadd.s32 %s25, %s26
        %p297 = scmp.lt.s32.totalorder %s296, 0
        %s298 = scalar_select %p297, %s296, 0
        %s299 = smul.u32 2, %s298
        %s300 = sadd.s32 %s25, %s26
        %p301 = scmp.lt.s32.totalorder %s300, 0
        %s302 = scalar_select %p301, %s300, 0
        %s303 = smul.u32 2, %s302
        %p304 = scmp.lt.s32.totalorder %s24, 1
        %s305 = scalar_select %p304, %s24, 1
        %p306 = scmp.lt.s32.totalorder %s303, 1
        %s307 = scalar_select %p306, %s303, 1
        %s308 = smul.addr %s305, 2
        %s309 = sadd.s32 %s307, %s308
        %s310 = scalar_lea.vmem %s1, %s309
        %s311 = sadd.s32 %s25, %s26
        %p312 = scmp.lt.s32.totalorder %s311, 0
        %s313 = scalar_select %p312, %s311, 0
        %s314 = smul.u32 2, %s313
        %p315 = scmp.lt.s32.totalorder %s24, 1
        %s316 = scalar_select %p315, %s24, 1
        %p317 = scmp.lt.s32.totalorder %s25, 0
        %s318 = scalar_select %p317, %s25, 0
        %s319 = sadd.s32 %s318, %s316
        %s320 = scalar_lea.vmem %s3, %s319
        %p321 = scmp.lt.s32.totalorder %s24, 1
        %s322 = scalar_select %p321, %s24, 1
        %p323 = scmp.lt.s32.totalorder %s25, 0
        %s324 = scalar_select %p323, %s25, 0
        %s325 = sadd.s32 %s324, %s322
        %s326 = scalar_lea.vmem %s4, %s325
        %s327 = sadd.s32 %s25, %s26
        %p328 = scmp.eq.s32.totalorder %s26, 0
        // Predicated region
        $region37: #{tpu_custom_call.1} parent=31 // pred_check
          %p329 = pneg %p328
        $region38: #{tpu_custom_call.1} parent=31 // pred_check_branch
          %331 = sbr.rel (%p329) target = $region40
        $region39: #{tpu_custom_call.1} parent=31 // pred_region
          %v332 = vlaneseq
          %vm333 = vcmp.ge.s32.totalorder %v332, 0
          %vm334 = vcmp.lt.s32.totalorder %v332, 256
          %vm335 = vmand %vm333, %vm334
          %336 = vst.msk [vmem:[#allocation2] sm:$0x3] %vm335, 0.0
          %337 = vst.msk [vmem:[#allocation3] sm:$0x3] %vm335, 0.0
        $region40: #{tpu_custom_call.1} parent=31 // pred_fallthru
          _
        %v338 = vld [vmem:[%s253] sm:$0xff]
        %v339 = vld [vmem:[%s310] sm:$0x3]
        %v340 = vld [vmem:[%s2] sm:$0xf]
        %v342 = vcombine.high %v338, %v338
        %vm344 = vcmask 1043456
        %v345 = vsel %vm344, %v338, -inf
        %v346 = vrot.slane %v345, 4
        %v347 = vmax.f32 %v345, %v346
        %v348 = vrot.slane %v347, 2
        %v349 = vmax.f32 %v347, %v348
        %v350 = vrot.slane %v349, 1
        %v351 = vmax.f32 %v349, %v350
        %v352 = vsel %vm344, %v342, -inf
        %v353 = vrot.slane %v352, 4
        %v354 = vmax.f32 %v352, %v353
        %v355 = vrot.slane %v354, 2
        %v356 = vmax.f32 %v354, %v355
        %v357 = vrot.slane %v356, 1
        %v358 = vmax.f32 %v356, %v357
        %v361 = vcombine.low %v351, %v358
        %v363 = vsub.f32 %v338, %v361
        %v364 = vmul.f32 %v363, 1.442695
        %v365 = vpow.pop %v364
        %v367 = vcombine.high %v365, %v365
        %v369 = vsel %vm344, %v365, 0.0
        %v370 = vrot.slane %v369, 4
        %v371 = vadd.f32 %v369, %v370
        %v372 = vrot.slane %v371, 2
        %v373 = vadd.f32 %v371, %v372
        %v374 = vrot.slane %v373, 1
        %v375 = vadd.f32 %v373, %v374
        %v376 = vsel %vm344, %v367, 0.0
        %v377 = vrot.slane %v376, 4
        %v378 = vadd.f32 %v376, %v377
        %v379 = vrot.slane %v378, 2
        %v380 = vadd.f32 %v378, %v379
        %v381 = vrot.slane %v380, 1
        %v382 = vadd.f32 %v380, %v381
        %v383 = vlog2.pop %v375
        %v384 = vmul.f32 %v383, 0.6931472
        %v385 = vlog2.pop %v382
        %v386 = vmul.f32 %v385, 0.6931472
        %v387 = vadd.f32 %v384, %v351
        %v388 = vadd.f32 %v386, %v358
        %v389 = vlaneseq
        %v390 = vshrl.u32 %v389, 7
        %v391 = vlaneseq
        %v392 = vshrl.u32 %v391, 7
        %v393 = vsub.s32 0, %v392
        %v394 = vrot.slane %v339, %v393
        %v395 = vlaneseq
        %v396 = vshrl.u32 %v395, 7
        %v397 = vsub.s32 1, %v396
        %v398 = vrot.slane %v339, %v397
        %vm399 = vcmp.eq.s32.totalorder %v390, %v394
        %vm400 = vcmp.eq.s32.totalorder %v390, %v398
        %v401 = vsel %vm399, %v338, 0.0
        %v402 = vsel %vm400, %v342, 0.0
        %v403 = vsel %vm344, %v401, 0.0
        %v404 = vrot.slane %v403, 4
        %v405 = vadd.f32 %v403, %v404
        %v406 = vrot.slane %v405, 2
        %v407 = vadd.f32 %v405, %v406
        %v408 = vrot.slane %v407, 1
        %v409 = vadd.f32 %v407, %v408
        %v410 = vsel %vm344, %v402, 0.0
        %v411 = vrot.slane %v410, 4
        %v412 = vadd.f32 %v410, %v411
        %v413 = vrot.slane %v412, 2
        %v414 = vadd.f32 %v412, %v413
        %v415 = vrot.slane %v414, 1
        %v416 = vadd.f32 %v414, %v415
        %418 = vset.pattern.permute.xlu0 0
        %419 = vperm.xlu0 %418, %v340
        %v420 = vpop.permute.xlu0 %419
        %v422 = vsel %vm399, %v420, 0.0
        %v423 = vsel %vm400, %v420, 0.0
        %v424 = vsel %vm344, %v422, 0.0
        %v425 = vrot.slane %v424, 4
        %v426 = vadd.f32 %v424, %v425
        %v427 = vrot.slane %v426, 2
        %v428 = vadd.f32 %v426, %v427
        %v429 = vrot.slane %v428, 1
        %v430 = vadd.f32 %v428, %v429
        %v431 = vsel %vm344, %v423, 0.0
        %v432 = vrot.slane %v431, 4
        %v433 = vadd.f32 %v431, %v432
        %v434 = vrot.slane %v433, 2
        %v435 = vadd.f32 %v433, %v434
        %v436 = vrot.slane %v435, 1
        %v437 = vadd.f32 %v435, %v436
        %v438 = vlaneseq
        %v439 = vand.u32 %v438, 127
        %v440 = vadd.s32 %v439, 128
        %s441 = smul.u32 %s327, 256
        %v442 = vstv %s441
        %v443 = vadd.s32 %v439, %v442
        %v444 = vadd.s32 %v440, %v442
        %vm445 = vcmp.ne.s32.totalorder %v339, 255
        %vm446 = vcmp.lt.s32.totalorder %v443, 256
        %vm447 = vcmp.lt.s32.totalorder %v444, 256
        %v448 = vsel %vm446, 1, 0
        %v449 = vsel %vm447, 1, 0
        %v450 = vcombine.low %v448, %v449
        %v452 = vunpack.c.l.s4 1966171168
        %v453 = vunpack.c.0.s8 %v452
        %v454 = vlaneseq
        %v455 = vshrl.u32 %v454, 7
        %v456 = vsub.s32 %v453, %v455
        %v457 = vrot.slane %v450, %v456
        %v459 = vunpack.c.l.s4 1966171168
        %v460 = vunpack.c.0.s8 %v459
        %v461 = vlaneseq
        %v462 = vshrl.u32 %v461, 7
        %v463 = vsub.s32 %v460, %v462
        %v464 = vrot.slane %v457, %v463
        %vm465 = vcmp.ne.s32.totalorder %v464, 0
        %vm466 = vmand %vm445, %vm465
        %v467 = vld [vmem:[#allocation2] sm:$0x3]
        %v468 = vsub.f32 %v387, %v409
        %v469 = vsub.f32 %v388, %v416
        %v470 = vmul.f32 %v430, %v468
        %v471 = vmul.f32 %v437, %v469
        %v474 = vcombine.low %v470, %v471
        %v476 = vunpack.c.l.s4 1966171168
        %v477 = vunpack.c.0.s8 %v476
        %v478 = vlaneseq
        %v479 = vshrl.u32 %v478, 7
        %v480 = vsub.s32 %v477, %v479
        %v481 = vrot.slane %v474, %v480
        %v483 = vunpack.c.l.s4 1966171168
        %v484 = vunpack.c.0.s8 %v483
        %v485 = vlaneseq
        %v486 = vshrl.u32 %v485, 7
        %v487 = vsub.s32 %v484, %v486
        %v488 = vrot.slane %v481, %v487
        %v490 = vsel %vm466, %v488, 0.0
        %v491 = vadd.f32 %v467, %v490
        %v492 = vlaneseq
        %vm493 = vcmp.ge.s32.totalorder %v492, 0
        %vm494 = vcmp.lt.s32.totalorder %v492, 256
        %vm495 = vmand %vm493, %vm494
        %496 = vst.msk [vmem:[#allocation2] sm:$0x3] %vm495, %v491
        %v497 = vld [vmem:[#allocation3] sm:$0x3]
        %v500 = vcombine.low %v430, %v437
        %v502 = vunpack.c.l.s4 1966171168
        %v503 = vunpack.c.0.s8 %v502
        %v504 = vlaneseq
        %v505 = vshrl.u32 %v504, 7
        %v506 = vsub.s32 %v503, %v505
        %v507 = vrot.slane %v500, %v506
        %v509 = vunpack.c.l.s4 1966171168
        %v510 = vunpack.c.0.s8 %v509
        %v511 = vlaneseq
        %v512 = vshrl.u32 %v511, 7
        %v513 = vsub.s32 %v510, %v512
        %v514 = vrot.slane %v507, %v513
        %v516 = vsel %vm466, %v514, 0.0
        %v517 = vadd.f32 %v497, %v516
        %518 = vst.msk [vmem:[#allocation3] sm:$0x3] %vm495, %v517
        // Predicated region
        $region41: #{tpu_custom_call.1} parent=31 // pred_check
          %p519 = pneg %p328
        $region42: #{tpu_custom_call.1} parent=31 // pred_check_branch
          %521 = sbr.rel (%p519) target = $region44
        $region43: #{tpu_custom_call.1} parent=31 // pred_region
          %v522 = vld [vmem:[#allocation2] sm:$0x3]
          %v524 = vlaneseq
          %v525 = vshrl.u32 %v524, 7
          %v526 = vsub.s32 0, %v525
          %v527 = vrot.slane %v522, %v526
          %v528 = vlaneseq
          %v529 = vshrl.u32 %v528, 7
          %v530 = vsub.s32 1, %v529
          %v531 = vrot.slane %v522, %v530
          %vm534 = vcmask 1040384
          %v535 = vsel %vm534, %v527, 0.0
          %v536 = vsel %vm534, %v531, 0.0
          %v537 = vadd.f32 %v535, %v536
          %538 = vadd.xlane.f32.xlu0 %v537
          %v539 = vpop.xlane.xlu0 %538
          %v540 = vrot.slane %v539, 4
          %v541 = vadd.f32 %v539, %v540
          %v542 = vrot.slane %v541, 2
          %v543 = vadd.f32 %v541, %v542
          %v544 = vrot.slane %v543, 1
          %v545 = vadd.f32 %v543, %v544
          %s546 = vtos %v545
          %v547 = vstv %s546
          %vm548 = vcmask 0
          %549 = vst.msk [vmem:[%s320] sm:$0x1] %vm548, %v547
          %v550 = vld [vmem:[#allocation3] sm:$0x3]
          %v552 = vlaneseq
          %v553 = vshrl.u32 %v552, 7
          %v554 = vsub.s32 0, %v553
          %v555 = vrot.slane %v550, %v554
          %v556 = vlaneseq
          %v557 = vshrl.u32 %v556, 7
          %v558 = vsub.s32 1, %v557
          %v559 = vrot.slane %v550, %v558
          %v562 = vsel %vm534, %v555, 0.0
          %v563 = vsel %vm534, %v559, 0.0
          %v564 = vadd.f32 %v562, %v563
          %565 = vadd.xlane.f32.xlu0 %v564
          %v566 = vpop.xlane.xlu0 %565
          %v567 = vrot.slane %v566, 4
          %v568 = vadd.f32 %v566, %v567
          %v569 = vrot.slane %v568, 2
          %v570 = vadd.f32 %v568, %v569
          %v571 = vrot.slane %v570, 1
          %v572 = vadd.f32 %v570, %v571
          %s573 = vtos %v572
          %v574 = vstv %s573
          %575 = vst.msk [vmem:[%s326] sm:$0x1] %vm548, %v574
        $region44: #{tpu_custom_call.1} parent=31 // pred_fallthru
          _
        %p576 = scmp.lt.s32.totalorder %s24, 1
        %s577 = scalar_select %p576, %s24, 1
        %p578 = scmp.lt.s32.totalorder %s25, 0
        %s579 = scalar_select %p578, %s25, 0
        %s580 = sadd.s32 %s579, %s577
        %s581 = scalar_lea.vmem %s3, %s580
        %p582 = scmp.lt.s32.totalorder %s24, 1
        %s583 = scalar_select %p582, %s24, 1
        %p584 = scmp.lt.s32.totalorder %s25, 0
        %s585 = scalar_select %p584, %s25, 0
        %s586 = sadd.s32 %s585, %s583
        %s587 = scalar_lea.vmem %s4, %s586
        // Predicated region
        $region45: #{tpu_custom_call.1} parent=31 // pred_check
          %p588 = pneg %p147
        $region46: #{tpu_custom_call.1} parent=31 // pred_check_branch
          %590 = sbr.rel (%p588) target = $region48
        $region47: #{tpu_custom_call.1} parent=31 // pred_region
          _
        $region48: #{tpu_custom_call.1} parent=31 // pred_fallthru
          _
        // Predicated region
        $region49: #{tpu_custom_call.1} parent=31 // pred_check
          %p591 = pneg %p175
        $region50: #{tpu_custom_call.1} parent=31 // pred_check_branch
          %593 = sbr.rel (%p591) target = $region52
        $region51: #{tpu_custom_call.1} parent=31 // pred_region
          _
        $region52: #{tpu_custom_call.1} parent=31 // pred_fallthru
          _
      $region32: #{tpu_custom_call.1} parent=5 // pred_fallthru
        _
      %p594 = scmp.le.s32.totalorder 2, %s14
      // Predicated region
      $region53: #{tpu_custom_call.1} parent=5 // pred_check
        %p595 = pneg %p594
      $region54: #{tpu_custom_call.1} parent=5 // pred_check_branch
        %597 = sbr.rel (%p595) target = $region56
      $region55: #{tpu_custom_call.1} parent=5 // pred_region
        %s598 = ssub.s32 %s14, 2
        // Predicated region
        $region57: #{tpu_custom_call.1} parent=55 // pred_check
          %p599 = pneg %p153
        $region58: #{tpu_custom_call.1} parent=55 // pred_check_branch
          %601 = sbr.rel (%p599) target = $region60
        $region59: #{tpu_custom_call.1} parent=55 // pred_region
          %p602 = scmp.lt.s32.totalorder %s27, 1
          %s603 = scalar_select %p602, %s27, 1
          %p604 = scmp.lt.s32.totalorder %s28, 0
          %s605 = scalar_select %p604, %s28, 0
          %s606 = sadd.s32 %s605, %s603
          %s607 = scalar_lea.vmem %s3, %s606
        $region60: #{tpu_custom_call.1} parent=55 // pred_fallthru
          _
        // Predicated region
        $region61: #{tpu_custom_call.1} parent=55 // pred_check
          %p608 = pneg %p181
        $region62: #{tpu_custom_call.1} parent=55 // pred_check_branch
          %610 = sbr.rel (%p608) target = $region64
        $region63: #{tpu_custom_call.1} parent=55 // pred_region
          %p611 = scmp.lt.s32.totalorder %s27, 1
          %s612 = scalar_select %p611, %s27, 1
          %p613 = scmp.lt.s32.totalorder %s28, 0
          %s614 = scalar_select %p613, %s28, 0
          %s615 = sadd.s32 %s614, %s612
          %s616 = scalar_lea.vmem %s4, %s615
        $region64: #{tpu_custom_call.1} parent=55 // pred_fallthru
          _
      $region56: #{tpu_custom_call.1} parent=5 // pred_fallthru
        _
    $region6: #{tpu_custom_call.1} parent=1 // loop_footer
      %s18 = sadd.s32 1, %s14
    $region7: #{tpu_custom_call.1} parent=1 // loop_footer_branch
      %13 = sbr.rel target = $region3
    $region8: #{tpu_custom_call.1} parent=1 // loop_exit
      _
    %617 = vsyncpa [#allocation5], 1
    %s618 = scalar_lea.sflag [#allocation5], 1
    %619 = vsyncpa %s618, 1

</llo_original>
